<compile_context>
chip_gen: v6e
topology: v6e:2x2x1
jax: 0.10.0
libtpu: 0.0.40
codegen_flags: <defaults>
</compile_context>

<pallas_src>
import jax
import jax.numpy as jnp
from jax.experimental import pallas as pl
from jax.experimental.pallas import tpu as pltpu

SELU_ALPHA = 1.6732632423543772
SELU_SCALE = 1.0507009873554805
NORM_EPS = 1e-12  # F.normalize default eps

D_IN = 640
F0, F1, F2 = 118, 64, 3          # true feature widths
P = 128                          # lane-padded feature width

# M = TB_MAX*8 = 1024 rows per grid step.  VMEM: x block 2.6MB + out 0.5MB,
# double-buffered, + ~0.5MB weights + compute temporaries ~= 11MB, well under
# the scoped limit we request below on every generation (v5e/v6e/v7x).
TB_MAX = 128


def _selu_pallas(x):
    # expm1(x) = tanh(x/2) * (exp(x) + 1)  -- exact identity, no cancellation.
    em1 = jnp.tanh(0.5 * x) * (jnp.exp(x) + 1.0)
    return SELU_SCALE * jnp.where(x > 0, x, SELU_ALPHA * em1)


def _selu_ref(x):
    # Plain-JAX / PyTorch-parity SELU (uses true expm1).
    return SELU_SCALE * jnp.where(x > 0, x, SELU_ALPHA * jnp.expm1(x))


def gaze_kernel(x_ref, w0_ref, b0_ref, w1_ref, b1_ref, w2_ref, b2_ref, o_ref):
    # x_ref: (TB, 8, 640) = sequence rows 64..71 of TB batch elements.
    tb = x_ref.shape[0]
    cdt = w0_ref.dtype                                  # matmul-input dtype (f32 or bf16)
    x = x_ref[...].reshape(tb * 8, D_IN).astype(cdt)    # (M, 640)

    h = jnp.dot(x, w0_ref[...], preferred_element_type=jnp.float32) + b0_ref[...]
    h = _selu_pallas(h)                                 # (M, 128), f32
    h = jnp.dot(h.astype(cdt), w1_ref[...], preferred_element_type=jnp.float32) + b1_ref[...]
    h = _selu_pallas(h)                                 # (M, 128), f32
    h = jnp.dot(h.astype(cdt), w2_ref[...], preferred_element_type=jnp.float32) + b2_ref[...]

    # F.normalize(dim=-1): v / max(||v||, eps) == v * rsqrt(max(sum_sq, eps^2)).
    # Padded lanes are exactly zero and do not change sum_sq.
    sum_sq = jnp.sum(h * h, axis=-1, keepdims=True)
    inv = jax.lax.rsqrt(jnp.maximum(sum_sq, NORM_EPS * NORM_EPS))
    o_ref[...] = (h * inv).reshape(tb, 8, P)


def prepare_params(params, matmul_dtype=jnp.float32):
    """One-time layout prep: call ONCE, cache, and reuse across forward calls.

    Transposes weights to (in, out) and zero-pads feature dims to 128 lanes
    (118->128, 64->128, 3->128).  Zero weights/biases contribute zero and
    SELU(0) == 0, so padded lanes stay exactly zero through the network.
    Biases stay f32 (bias-add / SELU / normalize run in f32 even when the
    matmul inputs are bf16).
    """
    w0, b0, w1, b1, w2, b2 = params
    w0t = jnp.zeros((D_IN, P), matmul_dtype).at[:, :F0].set(w0.T.astype(matmul_dtype))
    b0p = jnp.zeros((1, P), jnp.float32).at[:, :F0].set(jnp.reshape(b0, (1, F0)).astype(jnp.float32))
    w1t = jnp.zeros((P, P), matmul_dtype).at[:F0, :F1].set(w1.T.astype(matmul_dtype))
    b1p = jnp.zeros((1, P), jnp.float32).at[:, :F1].set(jnp.reshape(b1, (1, F1)).astype(jnp.float32))
    w2t = jnp.zeros((P, P), matmul_dtype).at[:F1, :F2].set(w2.T.astype(matmul_dtype))
    b2p = jnp.zeros((1, P), jnp.float32).at[:, :F2].set(jnp.reshape(b2, (1, F2)).astype(jnp.float32))
    return w0t, b0p, w1t, b1p, w2t, b2p


def _tensorcores_per_chip():
    try:
        kind = jax.devices()[0].device_kind.lower()
    except Exception:
        return 1
    # 2 TensorCores per chip on v7x (and megacore v4/v5p); 1 on v5e/v6e.
    return 2 if any(t in kind for t in ("7x", "v7", "v4", "v5p")) else 1


def _tile_and_steps(B, ncores):
    # One big step on single-TC chips; an even number of steps on 2-TC chips.
    steps = pl.cdiv(B, TB_MAX)
    if ncores > 1 and B >= ncores:
        steps = max(steps, ncores)
        steps = pl.cdiv(steps, ncores) * ncores
    tb = pl.cdiv(B, steps)           # steps * tb >= B; last block may be ragged
    return tb, steps


def gaze_forward(x, prepared_params, return_padded=False):
    """Forward pass; `prepared_params` is the cached output of prepare_params()."""
    B, S, D = x.shape
    assert D == D_IN and S >= 70, "expected x of shape (B, S>=70, 640)"
    # The kernel reads a fixed 8-row block at sequence offset 64..71.  For the
    # rare S in {70, 71} case, pad S to 72 so that block is fully in bounds.
    if S < 72:
        x = jnp.pad(x, ((0, 0), (0, 72 - S), (0, 0)))

    w0t, b0p, w1t, b1p, w2t, b2p = prepared_params
    tb, steps = _tile_and_steps(B, _tensorcores_per_chip())

    # Ragged last batch block: the extra rows read unspecified data, but rows
    # are computed independently and their out-of-bounds writes are dropped,
    # so the in-bounds results are unaffected.
    out_padded = pl.pallas_call(
        gaze_kernel,
        out_shape=jax.ShapeDtypeStruct((B, 8, P), jnp.float32),
        grid=(steps,),
        in_specs=[
            # x: batch-tiled; S-block index 8 (block size 8) -> rows 64..71 only.
            pl.BlockSpec((tb, 8, D_IN), lambda b: (b, 8, 0)),
            # Weights/biases: small grid-invariant blocks (constant index_map).
            # (Single-buffering them would save ~0.5 MB VMEM; not needed here.)
            pl.BlockSpec(w0t.shape, lambda b: (0, 0)),
            pl.BlockSpec(b0p.shape, lambda b: (0, 0)),
            pl.BlockSpec(w1t.shape, lambda b: (0, 0)),
            pl.BlockSpec(b1p.shape, lambda b: (0, 0)),
            pl.BlockSpec(w2t.shape, lambda b: (0, 0)),
            pl.BlockSpec(b2p.shape, lambda b: (0, 0)),
        ],
        out_specs=pl.BlockSpec((tb, 8, P), lambda b: (b, 0, 0)),
        compiler_params=pltpu.CompilerParams(
            dimension_semantics=("parallel",),
            vmem_limit_bytes=32 * 1024 * 1024,
        ),
    )(x, w0t, b0p, w1t, b1p, w2t, b2p)

    if return_padded:
        # (B, 8, 128): rows 0..5 / lanes 0..2 hold the result; rest is padding.
        # Lets a fused consumer skip the wrapper-side slice below.
        return out_padded
    return out_padded[:, :6, :3]


def init_params(key):
    # GradLinear init: weight ~ N(0, sqrt(1/in_features)), bias = 0.
    k0, k1, k2 = jax.random.split(key, 3)
    w0 = jax.random.normal(k0, (F0, D_IN), jnp.float32) * jnp.sqrt(1.0 / D_IN)
    b0 = jnp.zeros((1, F0), jnp.float32)
    w1 = jax.random.normal(k1, (F1, F0), jnp.float32) * jnp.sqrt(1.0 / F0)
    b1 = jnp.zeros((1, F1), jnp.float32)
    w2 = jax.random.normal(k2, (F2, F1), jnp.float32) * jnp.sqrt(1.0 / F1)
    b2 = jnp.zeros((1, F2), jnp.float32)
    return (w0, b0, w1, b1, w2, b2)


def _reference(x, params, matmul_dtype=jnp.float32):
    # Plain-JAX mirror of the PyTorch forward (true expm1-based SELU), with the
    # same "cast matmul inputs, accumulate in f32" policy as the kernel.
    w0, b0, w1, b1, w2, b2 = params
    c = lambda a: a.astype(matmul_dtype)
    h = jnp.dot(c(x), c(w0).T, preferred_element_type=jnp.float32) + b0
    h = h[:, 64:70]
    h = _selu_ref(h)
    h = jnp.dot(c(h), c(w1).T, preferred_element_type=jnp.float32) + b1
    h = _selu_ref(h)
    h = jnp.dot(c(h), c(w2).T, preferred_element_type=jnp.float32) + b2
    n = jnp.sqrt(jnp.sum(h * h, axis=-1, keepdims=True))
    return h / jnp.maximum(n, NORM_EPS)


if __name__ == "__main__":
    key = jax.random.PRNGKey(0)
    kx, kp = jax.random.split(key)

    B, S = 6, 72  # S >= 70 so the x[:, 64:70] slice is valid
    x = jax.random.normal(kx, (B, S, D_IN), jnp.float32)
    params = init_params(kp)

    # Use non-zero biases in the test so the bias path is actually exercised
    # (the module initializes them to zero, but they are learnable).
    kb0, kb1, kb2 = jax.random.split(jax.random.PRNGKey(1), 3)
    w0, b0, w1, b1, w2, b2 = params
    params = (w0, 0.1 * jax.random.normal(kb0, b0.shape, jnp.float32),
              w1, 0.1 * jax.random.normal(kb1, b1.shape, jnp.float32),
              w2, 0.1 * jax.random.normal(kb2, b2.shape, jnp.float32))

    # --- f32 matmul path (parity with the PyTorch forward) ---
    prepared_f32 = prepare_params(params)               # prepared once, cached
    out = jax.block_until_ready(gaze_forward(x, prepared_f32))
    ref = _reference(x, params)
    assert out.shape == (B, 6, 3), out.shape
    assert jnp.allclose(out, ref, atol=1e-4, rtol=1e-4), \
        float(jnp.max(jnp.abs(out - ref)))

    # --- bf16 matmul-input path (MXU-native; biggest win on v5e) ---
    prepared_bf16 = prepare_params(params, matmul_dtype=jnp.bfloat16)
    out16 = jax.block_until_ready(gaze_forward(x, prepared_bf16))
    ref16 = _reference(x, params, matmul_dtype=jnp.bfloat16)
    assert out16.shape == (B, 6, 3), out16.shape
    assert jnp.allclose(out16, ref16, atol=2e-3, rtol=2e-3), \
        float(jnp.max(jnp.abs(out16 - ref16)))

    print("KERNEL_OK")
</pallas_src>

<mosaic_0001>
module attributes {stable_mosaic.version = 11 : i64} {
  func.func @gaze_kernel(%arg0: i32, %arg1: memref<6x8x640xf32, #tpu.memory_space<vmem>>, %arg2: memref<640x128xf32, #tpu.memory_space<vmem>>, %arg3: memref<1x128xf32, #tpu.memory_space<vmem>>, %arg4: memref<128x128xf32, #tpu.memory_space<vmem>>, %arg5: memref<1x128xf32, #tpu.memory_space<vmem>>, %arg6: memref<128x128xf32, #tpu.memory_space<vmem>>, %arg7: memref<1x128xf32, #tpu.memory_space<vmem>>, %arg8: memref<6x8x128xf32, #tpu.memory_space<vmem>>) attributes {dimension_semantics = [#tpu.dimension_semantics<parallel>], iteration_bounds = array<i64: 1>, scalar_prefetch = 0 : i64, scratch_operands = 0 : i64, tpu.core_type = #tpu.core_type<tc>, window_params = [{transform_indices = @transform_0, window_bounds = array<i64: 6, 8, 640>}, {pipeline_mode = #tpu.pipeline_mode<synchronous>, transform_indices = @transform_1, window_bounds = array<i64: 640, 128>}, {pipeline_mode = #tpu.pipeline_mode<synchronous>, transform_indices = @transform_2, window_bounds = array<i64: 1, 128>}, {pipeline_mode = #tpu.pipeline_mode<synchronous>, transform_indices = @transform_3, window_bounds = array<i64: 128, 128>}, {pipeline_mode = #tpu.pipeline_mode<synchronous>, transform_indices = @transform_4, window_bounds = array<i64: 1, 128>}, {pipeline_mode = #tpu.pipeline_mode<synchronous>, transform_indices = @transform_5, window_bounds = array<i64: 128, 128>}, {pipeline_mode = #tpu.pipeline_mode<synchronous>, transform_indices = @transform_6, window_bounds = array<i64: 1, 128>}, {transform_indices = @transform_7, window_bounds = array<i64: 6, 8, 128>}]} {
    %c0 = arith.constant 0 : index
    %c0_0 = arith.constant 0 : index
    %c0_1 = arith.constant 0 : index
    %0 = vector.load %arg1[%c0, %c0_0, %c0_1] : memref<6x8x640xf32, #tpu.memory_space<vmem>>, vector<6x8x640xf32>
    %1 = vector.shape_cast %0 : vector<6x8x640xf32> to vector<48x640xf32>
    %c0_2 = arith.constant 0 : index
    %c0_3 = arith.constant 0 : index
    %2 = vector.load %arg2[%c0_2, %c0_3] : memref<640x128xf32, #tpu.memory_space<vmem>>, vector<640x128xf32>
    %cst = arith.constant dense<0.000000e+00> : vector<48x128xf32>
    %3 = tpu.matmul %1, %2, %cst {dimension_numbers = #tpu.dot_dimension_numbers<[1], [0], [0], [1], [0, 0, 1, 1], [], []>} : vector<48x640xf32>, vector<640x128xf32>, vector<48x128xf32> -> vector<48x128xf32>
    %c0_4 = arith.constant 0 : index
    %c0_5 = arith.constant 0 : index
    %4 = vector.load %arg3[%c0_4, %c0_5] : memref<1x128xf32, #tpu.memory_space<vmem>>, vector<1x128xf32>
    %5 = vector.broadcast %4 : vector<1x128xf32> to vector<48x128xf32>
    %6 = arith.addf %3, %5 : vector<48x128xf32>
    %cst_6 = arith.constant 5.000000e-01 : f32
    %7 = vector.broadcast %cst_6 : f32 to vector<48x128xf32>
    %8 = arith.mulf %7, %6 : vector<48x128xf32>
    %9 = math.tanh %8 : vector<48x128xf32>
    %10 = math.exp %6 : vector<48x128xf32>
    %cst_7 = arith.constant 1.000000e+00 : f32
    %11 = vector.broadcast %cst_7 : f32 to vector<48x128xf32>
    %12 = arith.addf %10, %11 : vector<48x128xf32>
    %13 = arith.mulf %9, %12 : vector<48x128xf32>
    %cst_8 = arith.constant 0.000000e+00 : f32
    %14 = vector.broadcast %cst_8 : f32 to vector<48x128xf32>
    %15 = arith.cmpf ogt, %6, %14 : vector<48x128xf32>
    %cst_9 = arith.constant 1.67326319 : f32
    %16 = vector.broadcast %cst_9 : f32 to vector<48x128xf32>
    %17 = arith.mulf %16, %13 : vector<48x128xf32>
    %18 = arith.select %15, %6, %17 : vector<48x128xi1>, vector<48x128xf32>
    %cst_10 = arith.constant 1.05070102 : f32
    %19 = vector.broadcast %cst_10 : f32 to vector<48x128xf32>
    %20 = arith.mulf %19, %18 : vector<48x128xf32>
    %c0_11 = arith.constant 0 : index
    %c0_12 = arith.constant 0 : index
    %21 = vector.load %arg4[%c0_11, %c0_12] : memref<128x128xf32, #tpu.memory_space<vmem>>, vector<128x128xf32>
    %cst_13 = arith.constant dense<0.000000e+00> : vector<48x128xf32>
    %22 = tpu.matmul %20, %21, %cst_13 {dimension_numbers = #tpu.dot_dimension_numbers<[1], [0], [0], [1], [0, 0, 1, 1], [], []>} : vector<48x128xf32>, vector<128x128xf32>, vector<48x128xf32> -> vector<48x128xf32>
    %c0_14 = arith.constant 0 : index
    %c0_15 = arith.constant 0 : index
    %23 = vector.load %arg5[%c0_14, %c0_15] : memref<1x128xf32, #tpu.memory_space<vmem>>, vector<1x128xf32>
    %24 = vector.broadcast %23 : vector<1x128xf32> to vector<48x128xf32>
    %25 = arith.addf %22, %24 : vector<48x128xf32>
    %cst_16 = arith.constant 5.000000e-01 : f32
    %26 = vector.broadcast %cst_16 : f32 to vector<48x128xf32>
    %27 = arith.mulf %26, %25 : vector<48x128xf32>
    %28 = math.tanh %27 : vector<48x128xf32>
    %29 = math.exp %25 : vector<48x128xf32>
    %cst_17 = arith.constant 1.000000e+00 : f32
    %30 = vector.broadcast %cst_17 : f32 to vector<48x128xf32>
    %31 = arith.addf %29, %30 : vector<48x128xf32>
    %32 = arith.mulf %28, %31 : vector<48x128xf32>
    %cst_18 = arith.constant 0.000000e+00 : f32
    %33 = vector.broadcast %cst_18 : f32 to vector<48x128xf32>
    %34 = arith.cmpf ogt, %25, %33 : vector<48x128xf32>
    %cst_19 = arith.constant 1.67326319 : f32
    %35 = vector.broadcast %cst_19 : f32 to vector<48x128xf32>
    %36 = arith.mulf %35, %32 : vector<48x128xf32>
    %37 = arith.select %34, %25, %36 : vector<48x128xi1>, vector<48x128xf32>
    %cst_20 = arith.constant 1.05070102 : f32
    %38 = vector.broadcast %cst_20 : f32 to vector<48x128xf32>
    %39 = arith.mulf %38, %37 : vector<48x128xf32>
    %c0_21 = arith.constant 0 : index
    %c0_22 = arith.constant 0 : index
    %40 = vector.load %arg6[%c0_21, %c0_22] : memref<128x128xf32, #tpu.memory_space<vmem>>, vector<128x128xf32>
    %cst_23 = arith.constant dense<0.000000e+00> : vector<48x128xf32>
    %41 = tpu.matmul %39, %40, %cst_23 {dimension_numbers = #tpu.dot_dimension_numbers<[1], [0], [0], [1], [0, 0, 1, 1], [], []>} : vector<48x128xf32>, vector<128x128xf32>, vector<48x128xf32> -> vector<48x128xf32>
    %c0_24 = arith.constant 0 : index
    %c0_25 = arith.constant 0 : index
    %42 = vector.load %arg7[%c0_24, %c0_25] : memref<1x128xf32, #tpu.memory_space<vmem>>, vector<1x128xf32>
    %43 = vector.broadcast %42 : vector<1x128xf32> to vector<48x128xf32>
    %44 = arith.addf %41, %43 : vector<48x128xf32>
    %45 = arith.mulf %44, %44 : vector<48x128xf32>
    %cst_26 = arith.constant dense<0.000000e+00> : vector<48xf32>
    %46 = vector.multi_reduction <add>, %45, %cst_26 [1] : vector<48x128xf32> to vector<48xf32>
    %47 = vector.shape_cast %46 : vector<48xf32> to vector<48x1xf32>
    %cst_27 = arith.constant 1.000000e-24 : f32
    %48 = vector.broadcast %cst_27 : f32 to vector<48x1xf32>
    %49 = arith.maximumf %47, %48 : vector<48x1xf32>
    %50 = math.rsqrt %49 : vector<48x1xf32>
    %51 = vector.broadcast %50 : vector<48x1xf32> to vector<48x128xf32>
    %52 = arith.mulf %44, %51 : vector<48x128xf32>
    %53 = vector.shape_cast %52 : vector<48x128xf32> to vector<6x8x128xf32>
    %c0_28 = arith.constant 0 : index
    %c0_29 = arith.constant 0 : index
    %c0_30 = arith.constant 0 : index
    %54 = vector.load %arg8[%c0_28, %c0_29, %c0_30] : memref<6x8x128xf32, #tpu.memory_space<vmem>>, vector<6x8x128xf32>
    tpu.vector_store %arg8[%c0_28, %c0_29, %c0_30], %53 {strides = array<i32>} : memref<6x8x128xf32, #tpu.memory_space<vmem>>, vector<6x8x128xf32>,
    return
  }
  func.func @transform_0(%arg0: i32) -> (i32, i32, i32) {
    %c8_i32 = arith.constant 8 : i32
    %c0_i32 = arith.constant 0 : i32
    %c0_i32_0 = arith.constant 0 : i32
    return %arg0, %c8_i32, %c0_i32 : i32, i32, i32
  }
  func.func @transform_1(%arg0: i32) -> (i32, i32) {
    %c0_i32 = arith.constant 0 : i32
    %c0_i32_0 = arith.constant 0 : i32
    %c0_i32_1 = arith.constant 0 : i32
    return %c0_i32, %c0_i32_0 : i32, i32
  }
  func.func @transform_2(%arg0: i32) -> (i32, i32) {
    %c0_i32 = arith.constant 0 : i32
    %c0_i32_0 = arith.constant 0 : i32
    %c0_i32_1 = arith.constant 0 : i32
    return %c0_i32, %c0_i32_0 : i32, i32
  }
  func.func @transform_3(%arg0: i32) -> (i32, i32) {
    %c0_i32 = arith.constant 0 : i32
    %c0_i32_0 = arith.constant 0 : i32
    %c0_i32_1 = arith.constant 0 : i32
    return %c0_i32, %c0_i32_0 : i32, i32
  }
  func.func @transform_4(%arg0: i32) -> (i32, i32) {
    %c0_i32 = arith.constant 0 : i32
    %c0_i32_0 = arith.constant 0 : i32
    %c0_i32_1 = arith.constant 0 : i32
    return %c0_i32, %c0_i32_0 : i32, i32
  }
  func.func @transform_5(%arg0: i32) -> (i32, i32) {
    %c0_i32 = arith.constant 0 : i32
    %c0_i32_0 = arith.constant 0 : i32
    %c0_i32_1 = arith.constant 0 : i32
    return %c0_i32, %c0_i32_0 : i32, i32
  }
  func.func @transform_6(%arg0: i32) -> (i32, i32) {
    %c0_i32 = arith.constant 0 : i32
    %c0_i32_0 = arith.constant 0 : i32
    %c0_i32_1 = arith.constant 0 : i32
    return %c0_i32, %c0_i32_0 : i32, i32
  }
  func.func @transform_7(%arg0: i32) -> (i32, i32, i32) {
    %c0_i32 = arith.constant 0 : i32
    %c0_i32_0 = arith.constant 0 : i32
    %c0_i32_1 = arith.constant 0 : i32
    return %arg0, %c0_i32, %c0_i32_0 : i32, i32, i32
  }
}

</mosaic_0001>

<llo_original>
// kernel: tpu_custom_call.1
$region0: #{tpu_custom_call.1}
  #allocation0 [shape = 'u32[]', space=smem, size = 0x4, offset = 0x4, fixed_abs, tag = 'smem constant byte address 0x4 - core index']
  #allocation1 [shape = 'u32[144,128]{1,0:T(1,128)}', space=vmem, size = 0x12000, scoped, tag = 'internal scratch']
  %s0 = inlined_call_operand.hbm [shape: f32[6,72,640], index: 0, kind: input, shape index: {}]
  %s1 = inlined_call_operand.hbm [shape: f32[640,128], index: 1, kind: input, shape index: {}]
  %s2 = inlined_call_operand.hbm [shape: f32[1,128], index: 2, kind: input, shape index: {}]
  %s3 = inlined_call_operand.hbm [shape: f32[128,128], index: 3, kind: input, shape index: {}]
  %s4 = inlined_call_operand.hbm [shape: f32[1,128], index: 4, kind: input, shape index: {}]
  %s5 = inlined_call_operand.hbm [shape: f32[128,128], index: 5, kind: input, shape index: {}]
  %s6 = inlined_call_operand.hbm [shape: f32[1,128], index: 6, kind: input, shape index: {}]
  %s7 = inlined_call_operand.hbm [shape: f32[6,8,128], index: 7, kind: output, shape index: {}]
  %s8 = sld [smem:[#allocation0]]
  $region66: #{tpu_custom_call.1} parent=0
    _
  %s10 = ssub.s32 1, %s8
  %s11 = scalar_select 0, %s10, %s8
  $region1: #{tpu_custom_call.1} parent=0
    #allocation2 [shape = 'u8[122880]{0}', space=vmem, size = 0x1e000, scoped, tag = 'input window, operand 0, single buffered']
    #allocation3 [shape = 's32[1]{0}', space=sflag, size = 0x4, scoped, tag = 'scoped memory for tpu_custom_call.1']
    #allocation4 [shape = 's32[1]{0}', space=sflag, size = 0x4, scoped, tag = 'scoped memory for tpu_custom_call.1']
    #allocation5 [shape = 'u8[327680]{0}', space=vmem, size = 0x50000, scoped, tag = 'input window, operand 1, single buffered']
    #allocation6 [shape = 's32[1]{0}', space=sflag, size = 0x4, scoped, tag = 'scoped memory for tpu_custom_call.1']
    #allocation7 [shape = 'u8[512]{0}', space=vmem, size = 0x400, scoped, tag = 'input window, operand 2, single buffered']
    #allocation8 [shape = 'u8[65536]{0}', space=vmem, size = 0x10000, scoped, tag = 'input window, operand 3, single buffered']
    #allocation9 [shape = 's32[1]{0}', space=sflag, size = 0x4, scoped, tag = 'scoped memory for tpu_custom_call.1']
    #allocation10 [shape = 'u8[512]{0}', space=vmem, size = 0x400, scoped, tag = 'input window, operand 4, single buffered']
    #allocation11 [shape = 'u8[65536]{0}', space=vmem, size = 0x10000, scoped, tag = 'input window, operand 5, single buffered']
    #allocation12 [shape = 's32[1]{0}', space=sflag, size = 0x4, scoped, tag = 'scoped memory for tpu_custom_call.1']
    #allocation13 [shape = 'u8[512]{0}', space=vmem, size = 0x400, scoped, tag = 'input window, operand 6, single buffered']
    #allocation14 [shape = 'u8[24576]{0}', space=vmem, size = 0x6000, scoped, tag = 'output window, operand 0, single buffered']
    %12 = vsyncpa [#allocation3], 0
    %13 = vsyncpa [#allocation6], 0
    %14 = vsyncpa [#allocation9], 0
    %15 = vsyncpa [#allocation12], 0
    %16 = vsyncpa [#allocation4], 0
    // Predicated region
    $region2: #{tpu_custom_call.1} parent=1 // pred_check
      _
    $region3: #{tpu_custom_call.1} parent=1 // pred_check_branch
      %18 = sbr.rel (0) target = $region5
    $region4: #{tpu_custom_call.1} parent=1 // pred_region
      %s20 = ssub.s32 3840, 3840
      %21 = vsyncadd [#allocation3], %s20
      %s22 = scalar_lea.hbm %s0, 5120
      %s23 = sshll.u32 [#allocation2], 4
      %s24 = int_to_ptr.vmem [resolvable:$true] %s23
      %29 = dma.hbm_to_vmem [thread:$0]  %s22, 3840, %s24, [#allocation3], 5760, 640, 40
    $region5: #{tpu_custom_call.1} parent=1 // pred_fallthru
      _
    // Predicated region
    $region6: #{tpu_custom_call.1} parent=1 // pred_check
      _
    $region7: #{tpu_custom_call.1} parent=1 // pred_check_branch
      %31 = sbr.rel (0) target = $region9
    $region8: #{tpu_custom_call.1} parent=1 // pred_region
      %s33 = ssub.s32 10240, 10240
      %34 = vsyncadd [#allocation6], %s33
      %s35 = sshll.u32 [#allocation5], 4
      %s36 = int_to_ptr.vmem [resolvable:$true] %s35
      %41 = dma.hbm_to_vmem [thread:$0]  %s1, 10240, %s36, [#allocation6], 128, 128, 8
    $region9: #{tpu_custom_call.1} parent=1 // pred_fallthru
      _
    // Predicated region
    $region10: #{tpu_custom_call.1} parent=1 // pred_check
      _
    $region11: #{tpu_custom_call.1} parent=1 // pred_check_branch
      %43 = sbr.rel (0) target = $region13
    $region12: #{tpu_custom_call.1} parent=1 // pred_region
      %s45 = ssub.s32 16, 16
      %46 = vsyncadd [#allocation6], %s45
      %s48 = sshll.u32 [#allocation7], 4
      %s49 = int_to_ptr.vmem [resolvable:$true] %s48
      %51 = dma.hbm_to_vmem [thread:$0]  %s2, 16, %s49, [#allocation6]
    $region13: #{tpu_custom_call.1} parent=1 // pred_fallthru
      _
    // Predicated region
    $region14: #{tpu_custom_call.1} parent=1 // pred_check
      _
    $region15: #{tpu_custom_call.1} parent=1 // pred_check_branch
      %53 = sbr.rel (0) target = $region17
    $region16: #{tpu_custom_call.1} parent=1 // pred_region
      %s55 = ssub.s32 2048, 2048
      %56 = vsyncadd [#allocation9], %s55
      %s57 = sshll.u32 [#allocation8], 4
      %s58 = int_to_ptr.vmem [resolvable:$true] %s57
      %63 = dma.hbm_to_vmem [thread:$0]  %s3, 2048, %s58, [#allocation9], 128, 128, 8
    $region17: #{tpu_custom_call.1} parent=1 // pred_fallthru
      _
    // Predicated region
    $region18: #{tpu_custom_call.1} parent=1 // pred_check
      _
    $region19: #{tpu_custom_call.1} parent=1 // pred_check_branch
      %65 = sbr.rel (0) target = $region21
    $region20: #{tpu_custom_call.1} parent=1 // pred_region
      %s67 = ssub.s32 16, 16
      %68 = vsyncadd [#allocation9], %s67
      %s70 = sshll.u32 [#allocation10], 4
      %s71 = int_to_ptr.vmem [resolvable:$true] %s70
      %73 = dma.hbm_to_vmem [thread:$0]  %s4, 16, %s71, [#allocation9]
    $region21: #{tpu_custom_call.1} parent=1 // pred_fallthru
      _
    // Predicated region
    $region22: #{tpu_custom_call.1} parent=1 // pred_check
      _
    $region23: #{tpu_custom_call.1} parent=1 // pred_check_branch
      %75 = sbr.rel (0) target = $region25
    $region24: #{tpu_custom_call.1} parent=1 // pred_region
      %s77 = ssub.s32 2048, 2048
      %78 = vsyncadd [#allocation12], %s77
      %s79 = sshll.u32 [#allocation11], 4
      %s80 = int_to_ptr.vmem [resolvable:$true] %s79
      %85 = dma.hbm_to_vmem [thread:$0]  %s5, 2048, %s80, [#allocation12], 128, 128, 8
    $region25: #{tpu_custom_call.1} parent=1 // pred_fallthru
      _
    // Predicated region
    $region26: #{tpu_custom_call.1} parent=1 // pred_check
      _
    $region27: #{tpu_custom_call.1} parent=1 // pred_check_branch
      %87 = sbr.rel (0) target = $region29
    $region28: #{tpu_custom_call.1} parent=1 // pred_region
      %s89 = ssub.s32 16, 16
      %90 = vsyncadd [#allocation12], %s89
      %s92 = sshll.u32 [#allocation13], 4
      %s93 = int_to_ptr.vmem [resolvable:$true] %s92
      %95 = dma.hbm_to_vmem [thread:$0]  %s6, 16, %s93, [#allocation12]
    $region29: #{tpu_custom_call.1} parent=1 // pred_fallthru
      _
    // Predicated region
    $region30: #{tpu_custom_call.1} parent=1 // pred_check
      _
    $region31: #{tpu_custom_call.1} parent=1 // pred_check_branch
      %97 = sbr.rel (0) target = $region33
    $region32: #{tpu_custom_call.1} parent=1 // pred_region
      %98 = dma.done [#allocation3], 3840
    $region33: #{tpu_custom_call.1} parent=1 // pred_fallthru
      _
    // Predicated region
    $region34: #{tpu_custom_call.1} parent=1 // pred_check
      _
    $region35: #{tpu_custom_call.1} parent=1 // pred_check_branch
      %100 = sbr.rel (0) target = $region37
    $region36: #{tpu_custom_call.1} parent=1 // pred_region
      %101 = dma.done [#allocation6], 10240
    $region37: #{tpu_custom_call.1} parent=1 // pred_fallthru
      _
    // Predicated region
    $region38: #{tpu_custom_call.1} parent=1 // pred_check
      _
    $region39: #{tpu_custom_call.1} parent=1 // pred_check_branch
      %103 = sbr.rel (0) target = $region41
    $region40: #{tpu_custom_call.1} parent=1 // pred_region
      %104 = dma.done [#allocation6], 16
    $region41: #{tpu_custom_call.1} parent=1 // pred_fallthru
      _
    // Predicated region
    $region42: #{tpu_custom_call.1} parent=1 // pred_check
      _
    $region43: #{tpu_custom_call.1} parent=1 // pred_check_branch
      %106 = sbr.rel (0) target = $region45
    $region44: #{tpu_custom_call.1} parent=1 // pred_region
      %107 = dma.done [#allocation9], 2048
    $region45: #{tpu_custom_call.1} parent=1 // pred_fallthru
      _
    // Predicated region
    $region46: #{tpu_custom_call.1} parent=1 // pred_check
      _
    $region47: #{tpu_custom_call.1} parent=1 // pred_check_branch
      %109 = sbr.rel (0) target = $region49
    $region48: #{tpu_custom_call.1} parent=1 // pred_region
      %110 = dma.done [#allocation9], 16
    $region49: #{tpu_custom_call.1} parent=1 // pred_fallthru
      _
    // Predicated region
    $region50: #{tpu_custom_call.1} parent=1 // pred_check
      _
    $region51: #{tpu_custom_call.1} parent=1 // pred_check_branch
      %112 = sbr.rel (0) target = $region53
    $region52: #{tpu_custom_call.1} parent=1 // pred_region
      %113 = dma.done [#allocation12], 2048
    $region53: #{tpu_custom_call.1} parent=1 // pred_fallthru
      _
    // Predicated region
    $region54: #{tpu_custom_call.1} parent=1 // pred_check
      _
    $region55: #{tpu_custom_call.1} parent=1 // pred_check_branch
      %115 = sbr.rel (0) target = $region57
    $region56: #{tpu_custom_call.1} parent=1 // pred_region
      %116 = dma.done [#allocation12], 16
    $region57: #{tpu_custom_call.1} parent=1 // pred_fallthru
      _
    %v117 = vld [vmem:[#allocation2] sm:$0xff]
    %v118 = vld [vmem:[#allocation2 + $0x8] sm:$0xff]
    %v119 = vld [vmem:[#allocation2 + $0x10] sm:$0xff]
    %v120 = vld [vmem:[#allocation2 + $0x18] sm:$0xff]
    %v121 = vld [vmem:[#allocation2 + $0x20] sm:$0xff]
    %v122 = vld [vmem:[#allocation2 + $0x28] sm:$0xff]
    %v123 = vld [vmem:[#allocation2 + $0x30] sm:$0xff]
    %v124 = vld [vmem:[#allocation2 + $0x38] sm:$0xff]
    %v125 = vld [vmem:[#allocation2 + $0x40] sm:$0xff]
    %v126 = vld [vmem:[#allocation2 + $0x48] sm:$0xff]
    %v127 = vld [vmem:[#allocation2 + $0x50] sm:$0xff]
    %v128 = vld [vmem:[#allocation2 + $0x58] sm:$0xff]
    %v129 = vld [vmem:[#allocation2 + $0x60] sm:$0xff]
    %v130 = vld [vmem:[#allocation2 + $0x68] sm:$0xff]
    %v131 = vld [vmem:[#allocation2 + $0x70] sm:$0xff]
    %v132 = vld [vmem:[#allocation2 + $0x78] sm:$0xff]
    %v133 = vld [vmem:[#allocation2 + $0x80] sm:$0xff]
    %v134 = vld [vmem:[#allocation2 + $0x88] sm:$0xff]
    %v135 = vld [vmem:[#allocation2 + $0x90] sm:$0xff]
    %v136 = vld [vmem:[#allocation2 + $0x98] sm:$0xff]
    %v137 = vld [vmem:[#allocation2 + $0xa0] sm:$0xff]
    %v138 = vld [vmem:[#allocation2 + $0xa8] sm:$0xff]
    %v139 = vld [vmem:[#allocation2 + $0xb0] sm:$0xff]
    %v140 = vld [vmem:[#allocation2 + $0xb8] sm:$0xff]
    %v141 = vld [vmem:[#allocation2 + $0xc0] sm:$0xff]
    %v142 = vld [vmem:[#allocation2 + $0xc8] sm:$0xff]
    %v143 = vld [vmem:[#allocation2 + $0xd0] sm:$0xff]
    %v144 = vld [vmem:[#allocation2 + $0xd8] sm:$0xff]
    %v145 = vld [vmem:[#allocation2 + $0xe0] sm:$0xff]
    %v146 = vld [vmem:[#allocation2 + $0xe8] sm:$0xff]
    %v147 = vld [vmem:[#allocation5] sm:$0xff]
    %v148 = vld [vmem:[#allocation5 + $0x8] sm:$0xff]
    %v149 = vld [vmem:[#allocation5 + $0x10] sm:$0xff]
    %v150 = vld [vmem:[#allocation5 + $0x18] sm:$0xff]
    %v151 = vld [vmem:[#allocation5 + $0x20] sm:$0xff]
    %v152 = vld [vmem:[#allocation5 + $0x28] sm:$0xff]
    %v153 = vld [vmem:[#allocation5 + $0x30] sm:$0xff]
    %v154 = vld [vmem:[#allocation5 + $0x38] sm:$0xff]
    %v155 = vld [vmem:[#allocation5 + $0x40] sm:$0xff]
    %v156 = vld [vmem:[#allocation5 + $0x48] sm:$0xff]
    %v157 = vld [vmem:[#allocation5 + $0x50] sm:$0xff]
    %v158 = vld [vmem:[#allocation5 + $0x58] sm:$0xff]
    %v159 = vld [vmem:[#allocation5 + $0x60] sm:$0xff]
    %v160 = vld [vmem:[#allocation5 + $0x68] sm:$0xff]
    %v161 = vld [vmem:[#allocation5 + $0x70] sm:$0xff]
    %v162 = vld [vmem:[#allocation5 + $0x78] sm:$0xff]
    %v163 = vld [vmem:[#allocation5 + $0x80] sm:$0xff]
    %v164 = vld [vmem:[#allocation5 + $0x88] sm:$0xff]
    %v165 = vld [vmem:[#allocation5 + $0x90] sm:$0xff]
    %v166 = vld [vmem:[#allocation5 + $0x98] sm:$0xff]
    %v167 = vld [vmem:[#allocation5 + $0xa0] sm:$0xff]
    %v168 = vld [vmem:[#allocation5 + $0xa8] sm:$0xff]
    %v169 = vld [vmem:[#allocation5 + $0xb0] sm:$0xff]
    %v170 = vld [vmem:[#allocation5 + $0xb8] sm:$0xff]
    %v171 = vld [vmem:[#allocation5 + $0xc0] sm:$0xff]
    %v172 = vld [vmem:[#allocation5 + $0xc8] sm:$0xff]
    %v173 = vld [vmem:[#allocation5 + $0xd0] sm:$0xff]
    %v174 = vld [vmem:[#allocation5 + $0xd8] sm:$0xff]
    %v175 = vld [vmem:[#allocation5 + $0xe0] sm:$0xff]
    %v176 = vld [vmem:[#allocation5 + $0xe8] sm:$0xff]
    %v177 = vld [vmem:[#allocation5 + $0xf0] sm:$0xff]
    %v178 = vld [vmem:[#allocation5 + $0xf8] sm:$0xff]
    %v179 = vld [vmem:[#allocation5 + $0x100] sm:$0xff]
    %v180 = vld [vmem:[#allocation5 + $0x108] sm:$0xff]
    %v181 = vld [vmem:[#allocation5 + $0x110] sm:$0xff]
    %v182 = vld [vmem:[#allocation5 + $0x118] sm:$0xff]
    %v183 = vld [vmem:[#allocation5 + $0x120] sm:$0xff]
    %v184 = vld [vmem:[#allocation5 + $0x128] sm:$0xff]
    %v185 = vld [vmem:[#allocation5 + $0x130] sm:$0xff]
    %v186 = vld [vmem:[#allocation5 + $0x138] sm:$0xff]
    %v187 = vld [vmem:[#allocation5 + $0x140] sm:$0xff]
    %v188 = vld [vmem:[#allocation5 + $0x148] sm:$0xff]
    %v189 = vld [vmem:[#allocation5 + $0x150] sm:$0xff]
    %v190 = vld [vmem:[#allocation5 + $0x158] sm:$0xff]
    %v191 = vld [vmem:[#allocation5 + $0x160] sm:$0xff]
    %v192 = vld [vmem:[#allocation5 + $0x168] sm:$0xff]
    %v193 = vld [vmem:[#allocation5 + $0x170] sm:$0xff]
    %v194 = vld [vmem:[#allocation5 + $0x178] sm:$0xff]
    %v195 = vld [vmem:[#allocation5 + $0x180] sm:$0xff]
    %v196 = vld [vmem:[#allocation5 + $0x188] sm:$0xff]
    %v197 = vld [vmem:[#allocation5 + $0x190] sm:$0xff]
    %v198 = vld [vmem:[#allocation5 + $0x198] sm:$0xff]
    %v199 = vld [vmem:[#allocation5 + $0x1a0] sm:$0xff]
    %v200 = vld [vmem:[#allocation5 + $0x1a8] sm:$0xff]
    %v201 = vld [vmem:[#allocation5 + $0x1b0] sm:$0xff]
    %v202 = vld [vmem:[#allocation5 + $0x1b8] sm:$0xff]
    %v203 = vld [vmem:[#allocation5 + $0x1c0] sm:$0xff]
    %v204 = vld [vmem:[#allocation5 + $0x1c8] sm:$0xff]
    %v205 = vld [vmem:[#allocation5 + $0x1d0] sm:$0xff]
    %v206 = vld [vmem:[#allocation5 + $0x1d8] sm:$0xff]
    %v207 = vld [vmem:[#allocation5 + $0x1e0] sm:$0xff]
    %v208 = vld [vmem:[#allocation5 + $0x1e8] sm:$0xff]
    %v209 = vld [vmem:[#allocation5 + $0x1f0] sm:$0xff]
    %v210 = vld [vmem:[#allocation5 + $0x1f8] sm:$0xff]
    %v211 = vld [vmem:[#allocation5 + $0x200] sm:$0xff]
    %v212 = vld [vmem:[#allocation5 + $0x208] sm:$0xff]
    %v213 = vld [vmem:[#allocation5 + $0x210] sm:$0xff]
    %v214 = vld [vmem:[#allocation5 + $0x218] sm:$0xff]
    %v215 = vld [vmem:[#allocation5 + $0x220] sm:$0xff]
    %v216 = vld [vmem:[#allocation5 + $0x228] sm:$0xff]
    %v217 = vld [vmem:[#allocation5 + $0x230] sm:$0xff]
    %v218 = vld [vmem:[#allocation5 + $0x238] sm:$0xff]
    %v219 = vld [vmem:[#allocation5 + $0x240] sm:$0xff]
    %v220 = vld [vmem:[#allocation5 + $0x248] sm:$0xff]
    %v221 = vld [vmem:[#allocation5 + $0x250] sm:$0xff]
    %v222 = vld [vmem:[#allocation5 + $0x258] sm:$0xff]
    %v223 = vld [vmem:[#allocation5 + $0x260] sm:$0xff]
    %v224 = vld [vmem:[#allocation5 + $0x268] sm:$0xff]
    %v225 = vld [vmem:[#allocation5 + $0x270] sm:$0xff]
    %v226 = vld [vmem:[#allocation5 + $0x278] sm:$0xff]
    %v227 = vld [vmem:[#allocation7] sm:$0x1]
    %v229 = vlaneseq
    %v230 = vshrl.u32 %v229, 7
    %v231 = vsub.s32 0, %v230
    %v232 = vrot.slane %v227, %v231
    %234 = vmatprep.subr.mxu0 0.0
    %235 = vmatpush1.msra.mxu0 %v162
    %236 = vmatprep.subr.mxu0 0.0
    %237 = vmatpush1.msra.mxu0 %v161
    %238 = vmatprep.subr.mxu0 0.0
    %239 = vmatpush1.msra.mxu0 %v160
    %240 = vmatprep.subr.mxu0 0.0
    %241 = vmatpush1.msra.mxu0 %v159
    %242 = vmatprep.subr.mxu0 0.0
    %243 = vmatpush1.msra.mxu0 %v158
    %244 = vmatprep.subr.mxu0 0.0
    %245 = vmatpush1.msra.mxu0 %v157
    %246 = vmatprep.subr.mxu0 0.0
    %247 = vmatpush1.msra.mxu0 %v156
    %248 = vmatprep.subr.mxu0 0.0
    %249 = vmatpush1.msra.mxu0 %v155
    %250 = vmatprep.subr.mxu0 0.0
    %251 = vmatpush1.msra.mxu0 %v154
    %252 = vmatprep.subr.mxu0 0.0
    %253 = vmatpush1.msra.mxu0 %v153
    %254 = vmatprep.subr.mxu0 0.0
    %255 = vmatpush1.msra.mxu0 %v152
    %256 = vmatprep.subr.mxu0 0.0
    %257 = vmatpush1.msra.mxu0 %v151
    %258 = vmatprep.subr.mxu0 0.0
    %259 = vmatpush1.msra.mxu0 %v150
    %260 = vmatprep.subr.mxu0 0.0
    %261 = vmatpush1.msra.mxu0 %v149
    %262 = vmatprep.subr.mxu0 0.0
    %263 = vmatpush1.msra.mxu0 %v148
    %264 = vmatprep.subr.mxu0 0.0
    %265 = vmatpush1.msra.mxu0 %v147
    %266 = vmatprep.subr.mxu0 0.0
    %267 = vmatpush2.msra.mxu0 %v178
    %268 = vmatprep.subr.mxu0 0.0
    %269 = vmatpush2.msra.mxu0 %v177
    %270 = vmatprep.subr.mxu0 0.0
    %271 = vmatpush2.msra.mxu0 %v176
    %272 = vmatprep.subr.mxu0 0.0
    %273 = vmatpush2.msra.mxu0 %v175
    %274 = vmatprep.subr.mxu0 0.0
    %275 = vmatpush2.msra.mxu0 %v174
    %276 = vmatprep.subr.mxu0 0.0
    %277 = vmatpush2.msra.mxu0 %v173
    %278 = vmatprep.subr.mxu0 0.0
    %279 = vmatpush2.msra.mxu0 %v172
    %280 = vmatprep.subr.mxu0 0.0
    %281 = vmatpush2.msra.mxu0 %v171
    %282 = vmatprep.subr.mxu0 0.0
    %283 = vmatpush2.msra.mxu0 %v170
    %284 = vmatprep.subr.mxu0 0.0
    %285 = vmatpush2.msra.mxu0 %v169
    %286 = vmatprep.subr.mxu0 0.0
    %287 = vmatpush2.msra.mxu0 %v168
    %288 = vmatprep.subr.mxu0 0.0
    %289 = vmatpush2.msra.mxu0 %v167
    %290 = vmatprep.subr.mxu0 0.0
    %291 = vmatpush2.msra.mxu0 %v166
    %292 = vmatprep.subr.mxu0 0.0
    %293 = vmatpush2.msra.mxu0 %v165
    %294 = vmatprep.subr.mxu0 0.0
    %295 = vmatpush2.msra.mxu0 %v164
    %296 = vmatprep.subr.mxu0 0.0
    %297 = vmatpush2.msra.mxu0 %v163
    %298 = vmatprep.mubr.f32.mxu0 %v118
    %299 = vmatmul.mubr.f32.gmra.mxu0 %v117
    %v300 = vpop.f32.mrf.mxu0
    %v301 = vadd.f32 %v232, %v300
    %v302 = vpop.f32.mrf.mxu0
    %303 = vmatprep.mubr.f32.mxu0 %v123
    %304 = vmatmul.mubr.f32.gmra.mxu0 %v122
    %v305 = vpop.f32.mrf.mxu0
    %v306 = vadd.f32 %v232, %v305
    %v307 = vpop.f32.mrf.mxu0
    %308 = vmatprep.mubr.f32.mxu0 %v128
    %309 = vmatmul.mubr.f32.gmra.mxu0 %v127
    %v310 = vpop.f32.mrf.mxu0
    %v311 = vadd.f32 %v232, %v310
    %v312 = vpop.f32.mrf.mxu0
    %313 = vmatprep.mubr.f32.mxu0 %v133
    %314 = vmatmul.mubr.f32.gmra.mxu0 %v132
    %v315 = vpop.f32.mrf.mxu0
    %v316 = vadd.f32 %v232, %v315
    %v317 = vpop.f32.mrf.mxu0
    %318 = vmatprep.mubr.f32.mxu0 %v138
    %319 = vmatmul.mubr.f32.gmra.mxu0 %v137
    %v320 = vpop.f32.mrf.mxu0
    %v321 = vadd.f32 %v232, %v320
    %v322 = vpop.f32.mrf.mxu0
    %323 = vmatprep.mubr.f32.mxu0 %v143
    %324 = vmatmul.mubr.f32.gmra.mxu0 %v142
    %v325 = vpop.f32.mrf.mxu0
    %v326 = vadd.f32 %v232, %v325
    %v327 = vpop.f32.mrf.mxu0
    %328 = vdwg.mxu0
    %329 = vmatprep.subr.mxu0 0.0
    %330 = vmatpush1.msra.mxu0 %v194
    %331 = vmatprep.subr.mxu0 0.0
    %332 = vmatpush1.msra.mxu0 %v193
    %333 = vmatprep.subr.mxu0 0.0
    %334 = vmatpush1.msra.mxu0 %v192
    %335 = vmatprep.subr.mxu0 0.0
    %336 = vmatpush1.msra.mxu0 %v191
    %337 = vmatprep.subr.mxu0 0.0
    %338 = vmatpush1.msra.mxu0 %v190
    %339 = vmatprep.subr.mxu0 0.0
    %340 = vmatpush1.msra.mxu0 %v189
    %341 = vmatprep.subr.mxu0 0.0
    %342 = vmatpush1.msra.mxu0 %v188
    %343 = vmatprep.subr.mxu0 0.0
    %344 = vmatpush1.msra.mxu0 %v187
    %345 = vmatprep.subr.mxu0 0.0
    %346 = vmatpush1.msra.mxu0 %v186
    %347 = vmatprep.subr.mxu0 0.0
    %348 = vmatpush1.msra.mxu0 %v185
    %349 = vmatprep.subr.mxu0 0.0
    %350 = vmatpush1.msra.mxu0 %v184
    %351 = vmatprep.subr.mxu0 0.0
    %352 = vmatpush1.msra.mxu0 %v183
    %353 = vmatprep.subr.mxu0 0.0
    %354 = vmatpush1.msra.mxu0 %v182
    %355 = vmatprep.subr.mxu0 0.0
    %356 = vmatpush1.msra.mxu0 %v181
    %357 = vmatprep.subr.mxu0 0.0
    %358 = vmatpush1.msra.mxu0 %v180
    %359 = vmatprep.subr.mxu0 0.0
    %360 = vmatpush1.msra.mxu0 %v179
    %361 = vmatprep.subr.mxu0 0.0
    %362 = vmatpush2.msra.mxu0 %v210
    %363 = vmatprep.subr.mxu0 0.0
    %364 = vmatpush2.msra.mxu0 %v209
    %365 = vmatprep.subr.mxu0 0.0
    %366 = vmatpush2.msra.mxu0 %v208
    %367 = vmatprep.subr.mxu0 0.0
    %368 = vmatpush2.msra.mxu0 %v207
    %369 = vmatprep.subr.mxu0 0.0
    %370 = vmatpush2.msra.mxu0 %v206
    %371 = vmatprep.subr.mxu0 0.0
    %372 = vmatpush2.msra.mxu0 %v205
    %373 = vmatprep.subr.mxu0 0.0
    %374 = vmatpush2.msra.mxu0 %v204
    %375 = vmatprep.subr.mxu0 0.0
    %376 = vmatpush2.msra.mxu0 %v203
    %377 = vmatprep.subr.mxu0 0.0
    %378 = vmatpush2.msra.mxu0 %v202
    %379 = vmatprep.subr.mxu0 0.0
    %380 = vmatpush2.msra.mxu0 %v201
    %381 = vmatprep.subr.mxu0 0.0
    %382 = vmatpush2.msra.mxu0 %v200
    %383 = vmatprep.subr.mxu0 0.0
    %384 = vmatpush2.msra.mxu0 %v199
    %385 = vmatprep.subr.mxu0 0.0
    %386 = vmatpush2.msra.mxu0 %v198
    %387 = vmatprep.subr.mxu0 0.0
    %388 = vmatpush2.msra.mxu0 %v197
    %389 = vmatprep.subr.mxu0 0.0
    %390 = vmatpush2.msra.mxu0 %v196
    %391 = vmatprep.subr.mxu0 0.0
    %392 = vmatpush2.msra.mxu0 %v195
    %393 = vmatprep.mubr.f32.mxu0 %v120
    %394 = vmatmul.mubr.f32.gmra.mxu0 %v119
    %v395 = vpop.f32.mrf.mxu0
    %v396 = vadd.f32 %v301, %v395
    %v397 = vpop.f32.mrf.mxu0
    %398 = vmatprep.mubr.f32.mxu0 %v125
    %399 = vmatmul.mubr.f32.gmra.mxu0 %v124
    %v400 = vpop.f32.mrf.mxu0
    %v401 = vadd.f32 %v306, %v400
    %v402 = vpop.f32.mrf.mxu0
    %403 = vmatprep.mubr.f32.mxu0 %v130
    %404 = vmatmul.mubr.f32.gmra.mxu0 %v129
    %v405 = vpop.f32.mrf.mxu0
    %v406 = vadd.f32 %v311, %v405
    %v407 = vpop.f32.mrf.mxu0
    %408 = vmatprep.mubr.f32.mxu0 %v135
    %409 = vmatmul.mubr.f32.gmra.mxu0 %v134
    %v410 = vpop.f32.mrf.mxu0
    %v411 = vadd.f32 %v316, %v410
    %v412 = vpop.f32.mrf.mxu0
    %413 = vmatprep.mubr.f32.mxu0 %v140
    %414 = vmatmul.mubr.f32.gmra.mxu0 %v139
    %v415 = vpop.f32.mrf.mxu0
    %v416 = vadd.f32 %v321, %v415
    %v417 = vpop.f32.mrf.mxu0
    %418 = vmatprep.mubr.f32.mxu0 %v145
    %419 = vmatmul.mubr.f32.gmra.mxu0 %v144
    %v420 = vpop.f32.mrf.mxu0
    %v421 = vadd.f32 %v326, %v420
    %v422 = vpop.f32.mrf.mxu0
    %423 = vdwg.mxu0
    %424 = vmatprep.subr.mxu0 0.0
    %425 = vmatpush1.msra.mxu0 %v226
    %426 = vmatprep.subr.mxu0 0.0
    %427 = vmatpush1.msra.mxu0 %v225
    %428 = vmatprep.subr.mxu0 0.0
    %429 = vmatpush1.msra.mxu0 %v224
    %430 = vmatprep.subr.mxu0 0.0
    %431 = vmatpush1.msra.mxu0 %v223
    %432 = vmatprep.subr.mxu0 0.0
    %433 = vmatpush1.msra.mxu0 %v222
    %434 = vmatprep.subr.mxu0 0.0
    %435 = vmatpush1.msra.mxu0 %v221
    %436 = vmatprep.subr.mxu0 0.0
    %437 = vmatpush1.msra.mxu0 %v220
    %438 = vmatprep.subr.mxu0 0.0
    %439 = vmatpush1.msra.mxu0 %v219
    %440 = vmatprep.subr.mxu0 0.0
    %441 = vmatpush1.msra.mxu0 %v218
    %442 = vmatprep.subr.mxu0 0.0
    %443 = vmatpush1.msra.mxu0 %v217
    %444 = vmatprep.subr.mxu0 0.0
    %445 = vmatpush1.msra.mxu0 %v216
    %446 = vmatprep.subr.mxu0 0.0
    %447 = vmatpush1.msra.mxu0 %v215
    %448 = vmatprep.subr.mxu0 0.0
    %449 = vmatpush1.msra.mxu0 %v214
    %450 = vmatprep.subr.mxu0 0.0
    %451 = vmatpush1.msra.mxu0 %v213
    %452 = vmatprep.subr.mxu0 0.0
    %453 = vmatpush1.msra.mxu0 %v212
    %454 = vmatprep.subr.mxu0 0.0
    %455 = vmatpush1.msra.mxu0 %v211
    %456 = vmatprep.subr.mxu0 0.0
    %457 = vmatpush2.msra.mxu0 0.0
    %458 = vmatprep.subr.mxu0 0.0
    %459 = vmatpush2.msra.mxu0 0.0
    %460 = vmatprep.subr.mxu0 0.0
    %461 = vmatpush2.msra.mxu0 0.0
    %462 = vmatprep.subr.mxu0 0.0
    %463 = vmatpush2.msra.mxu0 0.0
    %464 = vmatprep.subr.mxu0 0.0
    %465 = vmatpush2.msra.mxu0 0.0
    %466 = vmatprep.subr.mxu0 0.0
    %467 = vmatpush2.msra.mxu0 0.0
    %468 = vmatprep.subr.mxu0 0.0
    %469 = vmatpush2.msra.mxu0 0.0
    %470 = vmatprep.subr.mxu0 0.0
    %471 = vmatpush2.msra.mxu0 0.0
    %472 = vmatprep.subr.mxu0 0.0
    %473 = vmatpush2.msra.mxu0 0.0
    %474 = vmatprep.subr.mxu0 0.0
    %475 = vmatpush2.msra.mxu0 0.0
    %476 = vmatprep.subr.mxu0 0.0
    %477 = vmatpush2.msra.mxu0 0.0
    %478 = vmatprep.subr.mxu0 0.0
    %479 = vmatpush2.msra.mxu0 0.0
    %480 = vmatprep.subr.mxu0 0.0
    %481 = vmatpush2.msra.mxu0 0.0
    %482 = vmatprep.subr.mxu0 0.0
    %483 = vmatpush2.msra.mxu0 0.0
    %484 = vmatprep.subr.mxu0 0.0
    %485 = vmatpush2.msra.mxu0 0.0
    %486 = vmatprep.subr.mxu0 0.0
    %487 = vmatpush2.msra.mxu0 0.0
    %488 = vmatprep.mubr.f32.mxu0 0.0
    %489 = vmatmul.mubr.f32.gmra.mxu0 %v121
    %v490 = vpop.f32.mrf.mxu0
    %v491 = vadd.f32 %v396, %v490
    %v492 = vpop.f32.mrf.mxu0
    %493 = vmatprep.mubr.f32.mxu0 0.0
    %494 = vmatmul.mubr.f32.gmra.mxu0 %v126
    %v495 = vpop.f32.mrf.mxu0
    %v496 = vadd.f32 %v401, %v495
    %v497 = vpop.f32.mrf.mxu0
    %498 = vmatprep.mubr.f32.mxu0 0.0
    %499 = vmatmul.mubr.f32.gmra.mxu0 %v131
    %v500 = vpop.f32.mrf.mxu0
    %v501 = vadd.f32 %v406, %v500
    %v502 = vpop.f32.mrf.mxu0
    %503 = vmatprep.mubr.f32.mxu0 0.0
    %504 = vmatmul.mubr.f32.gmra.mxu0 %v136
    %v505 = vpop.f32.mrf.mxu0
    %v506 = vadd.f32 %v411, %v505
    %v507 = vpop.f32.mrf.mxu0
    %508 = vmatprep.mubr.f32.mxu0 0.0
    %509 = vmatmul.mubr.f32.gmra.mxu0 %v141
    %v510 = vpop.f32.mrf.mxu0
    %v511 = vadd.f32 %v416, %v510
    %v512 = vpop.f32.mrf.mxu0
    %513 = vmatprep.mubr.f32.mxu0 0.0
    %514 = vmatmul.mubr.f32.gmra.mxu0 %v146
    %v515 = vpop.f32.mrf.mxu0
    %v516 = vadd.f32 %v421, %v515
    %v517 = vpop.f32.mrf.mxu0
    %518 = vdwg.mxu0
    %v519 = vmul.f32 %v491, 0.5
    %v520 = vmul.f32 %v496, 0.5
    %v521 = vmul.f32 %v501, 0.5
    %v522 = vmul.f32 %v506, 0.5
    %v523 = vmul.f32 %v511, 0.5
    %v524 = vmul.f32 %v516, 0.5
    %v525 = vtanh.pop %v519
    %v526 = vtanh.pop %v520
    %v527 = vtanh.pop %v521
    %v528 = vtanh.pop %v522
    %v529 = vtanh.pop %v523
    %v530 = vtanh.pop %v524
    %v531 = vmul.f32 %v491, 1.442695
    %v532 = vpow.pop %v531
    %v533 = vmul.f32 %v496, 1.442695
    %v534 = vpow.pop %v533
    %v535 = vmul.f32 %v501, 1.442695
    %v536 = vpow.pop %v535
    %v537 = vmul.f32 %v506, 1.442695
    %v538 = vpow.pop %v537
    %v539 = vmul.f32 %v511, 1.442695
    %v540 = vpow.pop %v539
    %v541 = vmul.f32 %v516, 1.442695
    %v542 = vpow.pop %v541
    %v543 = vadd.f32 %v532, 1.0
    %v544 = vadd.f32 %v534, 1.0
    %v545 = vadd.f32 %v536, 1.0
    %v546 = vadd.f32 %v538, 1.0
    %v547 = vadd.f32 %v540, 1.0
    %v548 = vadd.f32 %v542, 1.0
    %v549 = vmul.f32 %v525, %v543
    %v550 = vmul.f32 %v526, %v544
    %v551 = vmul.f32 %v527, %v545
    %v552 = vmul.f32 %v528, %v546
    %v553 = vmul.f32 %v529, %v547
    %v554 = vmul.f32 %v530, %v548
    %vm555 = vcmp.gt.f32.partialorder %v491, 0.0
    %vm556 = vcmp.gt.f32.partialorder %v496, 0.0
    %vm557 = vcmp.gt.f32.partialorder %v501, 0.0
    %vm558 = vcmp.gt.f32.partialorder %v506, 0.0
    %vm559 = vcmp.gt.f32.partialorder %v511, 0.0
    %vm560 = vcmp.gt.f32.partialorder %v516, 0.0
    %v561 = vmul.f32 %v549, 1.6732632
    %v562 = vmul.f32 %v550, 1.6732632
    %v563 = vmul.f32 %v551, 1.6732632
    %v564 = vmul.f32 %v552, 1.6732632
    %v565 = vmul.f32 %v553, 1.6732632
    %v566 = vmul.f32 %v554, 1.6732632
    %v567 = vsel %vm555, %v491, %v561
    %v568 = vsel %vm556, %v496, %v562
    %v569 = vsel %vm557, %v501, %v563
    %v570 = vsel %vm558, %v506, %v564
    %v571 = vsel %vm559, %v511, %v565
    %v572 = vsel %vm560, %v516, %v566
    %v573 = vmul.f32 %v567, 1.050701
    %v574 = vmul.f32 %v568, 1.050701
    %v575 = vmul.f32 %v569, 1.050701
    %v576 = vmul.f32 %v570, 1.050701
    %v577 = vmul.f32 %v571, 1.050701
    %v578 = vmul.f32 %v572, 1.050701
    %v579 = vld [vmem:[#allocation8] sm:$0xff]
    %v580 = vld [vmem:[#allocation8 + $0x8] sm:$0xff]
    %v581 = vld [vmem:[#allocation8 + $0x10] sm:$0xff]
    %v582 = vld [vmem:[#allocation8 + $0x18] sm:$0xff]
    %v583 = vld [vmem:[#allocation8 + $0x20] sm:$0xff]
    %v584 = vld [vmem:[#allocation8 + $0x28] sm:$0xff]
    %v585 = vld [vmem:[#allocation8 + $0x30] sm:$0xff]
    %v586 = vld [vmem:[#allocation8 + $0x38] sm:$0xff]
    %v587 = vld [vmem:[#allocation8 + $0x40] sm:$0xff]
    %v588 = vld [vmem:[#allocation8 + $0x48] sm:$0xff]
    %v589 = vld [vmem:[#allocation8 + $0x50] sm:$0xff]
    %v590 = vld [vmem:[#allocation8 + $0x58] sm:$0xff]
    %v591 = vld [vmem:[#allocation8 + $0x60] sm:$0xff]
    %v592 = vld [vmem:[#allocation8 + $0x68] sm:$0xff]
    %v593 = vld [vmem:[#allocation8 + $0x70] sm:$0xff]
    %v594 = vld [vmem:[#allocation8 + $0x78] sm:$0xff]
    %v595 = vld [vmem:[#allocation10] sm:$0x1]
    %v597 = vlaneseq
    %v598 = vshrl.u32 %v597, 7
    %v599 = vsub.s32 0, %v598
    %v600 = vrot.slane %v595, %v599
    %602 = vmatprep.subr.mxu0 0.0
    %603 = vmatpush1.msra.mxu0 %v594
    %604 = vmatprep.subr.mxu0 0.0
    %605 = vmatpush1.msra.mxu0 %v593
    %606 = vmatprep.subr.mxu0 0.0
    %607 = vmatpush1.msra.mxu0 %v592
    %608 = vmatprep.subr.mxu0 0.0
    %609 = vmatpush1.msra.mxu0 %v591
    %610 = vmatprep.subr.mxu0 0.0
    %611 = vmatpush1.msra.mxu0 %v590
    %612 = vmatprep.subr.mxu0 0.0
    %613 = vmatpush1.msra.mxu0 %v589
    %614 = vmatprep.subr.mxu0 0.0
    %615 = vmatpush1.msra.mxu0 %v588
    %616 = vmatprep.subr.mxu0 0.0
    %617 = vmatpush1.msra.mxu0 %v587
    %618 = vmatprep.subr.mxu0 0.0
    %619 = vmatpush1.msra.mxu0 %v586
    %620 = vmatprep.subr.mxu0 0.0
    %621 = vmatpush1.msra.mxu0 %v585
    %622 = vmatprep.subr.mxu0 0.0
    %623 = vmatpush1.msra.mxu0 %v584
    %624 = vmatprep.subr.mxu0 0.0
    %625 = vmatpush1.msra.mxu0 %v583
    %626 = vmatprep.subr.mxu0 0.0
    %627 = vmatpush1.msra.mxu0 %v582
    %628 = vmatprep.subr.mxu0 0.0
    %629 = vmatpush1.msra.mxu0 %v581
    %630 = vmatprep.subr.mxu0 0.0
    %631 = vmatpush1.msra.mxu0 %v580
    %632 = vmatprep.subr.mxu0 0.0
    %633 = vmatpush1.msra.mxu0 %v579
    %634 = vmatprep.subr.mxu0 0.0
    %635 = vmatpush2.msra.mxu0 0.0
    %636 = vmatprep.subr.mxu0 0.0
    %637 = vmatpush2.msra.mxu0 0.0
    %638 = vmatprep.subr.mxu0 0.0
    %639 = vmatpush2.msra.mxu0 0.0
    %640 = vmatprep.subr.mxu0 0.0
    %641 = vmatpush2.msra.mxu0 0.0
    %642 = vmatprep.subr.mxu0 0.0
    %643 = vmatpush2.msra.mxu0 0.0
    %644 = vmatprep.subr.mxu0 0.0
    %645 = vmatpush2.msra.mxu0 0.0
    %646 = vmatprep.subr.mxu0 0.0
    %647 = vmatpush2.msra.mxu0 0.0
    %648 = vmatprep.subr.mxu0 0.0
    %649 = vmatpush2.msra.mxu0 0.0
    %650 = vmatprep.subr.mxu0 0.0
    %651 = vmatpush2.msra.mxu0 0.0
    %652 = vmatprep.subr.mxu0 0.0
    %653 = vmatpush2.msra.mxu0 0.0
    %654 = vmatprep.subr.mxu0 0.0
    %655 = vmatpush2.msra.mxu0 0.0
    %656 = vmatprep.subr.mxu0 0.0
    %657 = vmatpush2.msra.mxu0 0.0
    %658 = vmatprep.subr.mxu0 0.0
    %659 = vmatpush2.msra.mxu0 0.0
    %660 = vmatprep.subr.mxu0 0.0
    %661 = vmatpush2.msra.mxu0 0.0
    %662 = vmatprep.subr.mxu0 0.0
    %663 = vmatpush2.msra.mxu0 0.0
    %664 = vmatprep.subr.mxu0 0.0
    %665 = vmatpush2.msra.mxu0 0.0
    %666 = vmatprep.mubr.f32.mxu0 0.0
    %667 = vmatmul.mubr.f32.gmra.mxu0 %v573
    %v668 = vpop.f32.mrf.mxu0
    %v669 = vadd.f32 %v600, %v668
    %v670 = vpop.f32.mrf.mxu0
    %671 = vmatprep.mubr.f32.mxu0 0.0
    %672 = vmatmul.mubr.f32.gmra.mxu0 %v574
    %v673 = vpop.f32.mrf.mxu0
    %v674 = vadd.f32 %v600, %v673
    %v675 = vpop.f32.mrf.mxu0
    %676 = vmatprep.mubr.f32.mxu0 0.0
    %677 = vmatmul.mubr.f32.gmra.mxu0 %v575
    %v678 = vpop.f32.mrf.mxu0
    %v679 = vadd.f32 %v600, %v678
    %v680 = vpop.f32.mrf.mxu0
    %681 = vmatprep.mubr.f32.mxu0 0.0
    %682 = vmatmul.mubr.f32.gmra.mxu0 %v576
    %v683 = vpop.f32.mrf.mxu0
    %v684 = vadd.f32 %v600, %v683
    %v685 = vpop.f32.mrf.mxu0
    %686 = vmatprep.mubr.f32.mxu0 0.0
    %687 = vmatmul.mubr.f32.gmra.mxu0 %v577
    %v688 = vpop.f32.mrf.mxu0
    %v689 = vadd.f32 %v600, %v688
    %v690 = vpop.f32.mrf.mxu0
    %691 = vmatprep.mubr.f32.mxu0 0.0
    %692 = vmatmul.mubr.f32.gmra.mxu0 %v578
    %v693 = vpop.f32.mrf.mxu0
    %v694 = vadd.f32 %v600, %v693
    %v695 = vpop.f32.mrf.mxu0
    %696 = vdwg.mxu0
    %v697 = vmul.f32 %v669, 0.5
    %v698 = vmul.f32 %v674, 0.5
    %v699 = vmul.f32 %v679, 0.5
    %v700 = vmul.f32 %v684, 0.5
    %v701 = vmul.f32 %v689, 0.5
    %v702 = vmul.f32 %v694, 0.5
    %v703 = vtanh.pop %v697
    %v704 = vtanh.pop %v698
    %v705 = vtanh.pop %v699
    %v706 = vtanh.pop %v700
    %v707 = vtanh.pop %v701
    %v708 = vtanh.pop %v702
    %v709 = vmul.f32 %v669, 1.442695
    %v710 = vpow.pop %v709
    %v711 = vmul.f32 %v674, 1.442695
    %v712 = vpow.pop %v711
    %v713 = vmul.f32 %v679, 1.442695
    %v714 = vpow.pop %v713
    %v715 = vmul.f32 %v684, 1.442695
    %v716 = vpow.pop %v715
    %v717 = vmul.f32 %v689, 1.442695
    %v718 = vpow.pop %v717
    %v719 = vmul.f32 %v694, 1.442695
    %v720 = vpow.pop %v719
    %v721 = vadd.f32 %v710, 1.0
    %v722 = vadd.f32 %v712, 1.0
    %v723 = vadd.f32 %v714, 1.0
    %v724 = vadd.f32 %v716, 1.0
    %v725 = vadd.f32 %v718, 1.0
    %v726 = vadd.f32 %v720, 1.0
    %v727 = vmul.f32 %v703, %v721
    %v728 = vmul.f32 %v704, %v722
    %v729 = vmul.f32 %v705, %v723
    %v730 = vmul.f32 %v706, %v724
    %v731 = vmul.f32 %v707, %v725
    %v732 = vmul.f32 %v708, %v726
    %vm733 = vcmp.gt.f32.partialorder %v669, 0.0
    %vm734 = vcmp.gt.f32.partialorder %v674, 0.0
    %vm735 = vcmp.gt.f32.partialorder %v679, 0.0
    %vm736 = vcmp.gt.f32.partialorder %v684, 0.0
    %vm737 = vcmp.gt.f32.partialorder %v689, 0.0
    %vm738 = vcmp.gt.f32.partialorder %v694, 0.0
    %v739 = vmul.f32 %v727, 1.6732632
    %v740 = vmul.f32 %v728, 1.6732632
    %v741 = vmul.f32 %v729, 1.6732632
    %v742 = vmul.f32 %v730, 1.6732632
    %v743 = vmul.f32 %v731, 1.6732632
    %v744 = vmul.f32 %v732, 1.6732632
    %v745 = vsel %vm733, %v669, %v739
    %v746 = vsel %vm734, %v674, %v740
    %v747 = vsel %vm735, %v679, %v741
    %v748 = vsel %vm736, %v684, %v742
    %v749 = vsel %vm737, %v689, %v743
    %v750 = vsel %vm738, %v694, %v744
    %v751 = vmul.f32 %v745, 1.050701
    %v752 = vmul.f32 %v746, 1.050701
    %v753 = vmul.f32 %v747, 1.050701
    %v754 = vmul.f32 %v748, 1.050701
    %v755 = vmul.f32 %v749, 1.050701
    %v756 = vmul.f32 %v750, 1.050701
    %v757 = vld [vmem:[#allocation11] sm:$0xff]
    %v758 = vld [vmem:[#allocation11 + $0x8] sm:$0xff]
    %v759 = vld [vmem:[#allocation11 + $0x10] sm:$0xff]
    %v760 = vld [vmem:[#allocation11 + $0x18] sm:$0xff]
    %v761 = vld [vmem:[#allocation11 + $0x20] sm:$0xff]
    %v762 = vld [vmem:[#allocation11 + $0x28] sm:$0xff]
    %v763 = vld [vmem:[#allocation11 + $0x30] sm:$0xff]
    %v764 = vld [vmem:[#allocation11 + $0x38] sm:$0xff]
    %v765 = vld [vmem:[#allocation11 + $0x40] sm:$0xff]
    %v766 = vld [vmem:[#allocation11 + $0x48] sm:$0xff]
    %v767 = vld [vmem:[#allocation11 + $0x50] sm:$0xff]
    %v768 = vld [vmem:[#allocation11 + $0x58] sm:$0xff]
    %v769 = vld [vmem:[#allocation11 + $0x60] sm:$0xff]
    %v770 = vld [vmem:[#allocation11 + $0x68] sm:$0xff]
    %v771 = vld [vmem:[#allocation11 + $0x70] sm:$0xff]
    %v772 = vld [vmem:[#allocation11 + $0x78] sm:$0xff]
    %v773 = vld [vmem:[#allocation13] sm:$0x1]
    %v775 = vlaneseq
    %v776 = vshrl.u32 %v775, 7
    %v777 = vsub.s32 0, %v776
    %v778 = vrot.slane %v773, %v777
    %780 = vmatprep.subr.mxu0 0.0
    %781 = vmatpush1.msra.mxu0 %v772
    %782 = vmatprep.subr.mxu0 0.0
    %783 = vmatpush1.msra.mxu0 %v771
    %784 = vmatprep.subr.mxu0 0.0
    %785 = vmatpush1.msra.mxu0 %v770
    %786 = vmatprep.subr.mxu0 0.0
    %787 = vmatpush1.msra.mxu0 %v769
    %788 = vmatprep.subr.mxu0 0.0
    %789 = vmatpush1.msra.mxu0 %v768
    %790 = vmatprep.subr.mxu0 0.0
    %791 = vmatpush1.msra.mxu0 %v767
    %792 = vmatprep.subr.mxu0 0.0
    %793 = vmatpush1.msra.mxu0 %v766
    %794 = vmatprep.subr.mxu0 0.0
    %795 = vmatpush1.msra.mxu0 %v765
    %796 = vmatprep.subr.mxu0 0.0
    %797 = vmatpush1.msra.mxu0 %v764
    %798 = vmatprep.subr.mxu0 0.0
    %799 = vmatpush1.msra.mxu0 %v763
    %800 = vmatprep.subr.mxu0 0.0
    %801 = vmatpush1.msra.mxu0 %v762
    %802 = vmatprep.subr.mxu0 0.0
    %803 = vmatpush1.msra.mxu0 %v761
    %804 = vmatprep.subr.mxu0 0.0
    %805 = vmatpush1.msra.mxu0 %v760
    %806 = vmatprep.subr.mxu0 0.0
    %807 = vmatpush1.msra.mxu0 %v759
    %808 = vmatprep.subr.mxu0 0.0
    %809 = vmatpush1.msra.mxu0 %v758
    %810 = vmatprep.subr.mxu0 0.0
    %811 = vmatpush1.msra.mxu0 %v757
    %812 = vmatprep.subr.mxu0 0.0
    %813 = vmatpush2.msra.mxu0 0.0
    %814 = vmatprep.subr.mxu0 0.0
    %815 = vmatpush2.msra.mxu0 0.0
    %816 = vmatprep.subr.mxu0 0.0
    %817 = vmatpush2.msra.mxu0 0.0
    %818 = vmatprep.subr.mxu0 0.0
    %819 = vmatpush2.msra.mxu0 0.0
    %820 = vmatprep.subr.mxu0 0.0
    %821 = vmatpush2.msra.mxu0 0.0
    %822 = vmatprep.subr.mxu0 0.0
    %823 = vmatpush2.msra.mxu0 0.0
    %824 = vmatprep.subr.mxu0 0.0
    %825 = vmatpush2.msra.mxu0 0.0
    %826 = vmatprep.subr.mxu0 0.0
    %827 = vmatpush2.msra.mxu0 0.0
    %828 = vmatprep.subr.mxu0 0.0
    %829 = vmatpush2.msra.mxu0 0.0
    %830 = vmatprep.subr.mxu0 0.0
    %831 = vmatpush2.msra.mxu0 0.0
    %832 = vmatprep.subr.mxu0 0.0
    %833 = vmatpush2.msra.mxu0 0.0
    %834 = vmatprep.subr.mxu0 0.0
    %835 = vmatpush2.msra.mxu0 0.0
    %836 = vmatprep.subr.mxu0 0.0
    %837 = vmatpush2.msra.mxu0 0.0
    %838 = vmatprep.subr.mxu0 0.0
    %839 = vmatpush2.msra.mxu0 0.0
    %840 = vmatprep.subr.mxu0 0.0
    %841 = vmatpush2.msra.mxu0 0.0
    %842 = vmatprep.subr.mxu0 0.0
    %843 = vmatpush2.msra.mxu0 0.0
    %844 = vmatprep.mubr.f32.mxu0 0.0
    %845 = vmatmul.mubr.f32.gmra.mxu0 %v751
    %v846 = vpop.f32.mrf.mxu0
    %v847 = vadd.f32 %v778, %v846
    %v848 = vpop.f32.mrf.mxu0
    %849 = vmatprep.mubr.f32.mxu0 0.0
    %850 = vmatmul.mubr.f32.gmra.mxu0 %v752
    %v851 = vpop.f32.mrf.mxu0
    %v852 = vadd.f32 %v778, %v851
    %v853 = vpop.f32.mrf.mxu0
    %854 = vmatprep.mubr.f32.mxu0 0.0
    %855 = vmatmul.mubr.f32.gmra.mxu0 %v753
    %v856 = vpop.f32.mrf.mxu0
    %v857 = vadd.f32 %v778, %v856
    %v858 = vpop.f32.mrf.mxu0
    %859 = vmatprep.mubr.f32.mxu0 0.0
    %860 = vmatmul.mubr.f32.gmra.mxu0 %v754
    %v861 = vpop.f32.mrf.mxu0
    %v862 = vadd.f32 %v778, %v861
    %v863 = vpop.f32.mrf.mxu0
    %864 = vmatprep.mubr.f32.mxu0 0.0
    %865 = vmatmul.mubr.f32.gmra.mxu0 %v755
    %v866 = vpop.f32.mrf.mxu0
    %v867 = vadd.f32 %v778, %v866
    %v868 = vpop.f32.mrf.mxu0
    %869 = vmatprep.mubr.f32.mxu0 0.0
    %870 = vmatmul.mubr.f32.gmra.mxu0 %v756
    %v871 = vpop.f32.mrf.mxu0
    %v872 = vadd.f32 %v778, %v871
    %v873 = vpop.f32.mrf.mxu0
    %874 = vdwg.mxu0
    %v875 = vmul.f32 %v847, %v847
    %v876 = vmul.f32 %v852, %v852
    %v877 = vmul.f32 %v857, %v857
    %v878 = vmul.f32 %v862, %v862
    %v879 = vmul.f32 %v867, %v867
    %v880 = vmul.f32 %v872, %v872
    %881 = vadd.xlane.f32.xlu0 %v875
    %v882 = vpop.xlane.xlu0 %881
    %883 = vadd.xlane.f32.xlu0 %v876
    %v884 = vpop.xlane.xlu0 %883
    %885 = vadd.xlane.f32.xlu0 %v877
    %v886 = vpop.xlane.xlu0 %885
    %887 = vadd.xlane.f32.xlu0 %v878
    %v888 = vpop.xlane.xlu0 %887
    %889 = vadd.xlane.f32.xlu0 %v879
    %v890 = vpop.xlane.xlu0 %889
    %891 = vadd.xlane.f32.xlu0 %v880
    %v892 = vpop.xlane.xlu0 %891
    %v893 = vmax.f32 %v882, 1e-24
    %v894 = vmax.f32 %v884, 1e-24
    %v895 = vmax.f32 %v886, 1e-24
    %v896 = vmax.f32 %v888, 1e-24
    %v897 = vmax.f32 %v890, 1e-24
    %v898 = vmax.f32 %v892, 1e-24
    %v899 = vrsqrt.pop %v893
    %v900 = vrsqrt.pop %v894
    %v901 = vrsqrt.pop %v895
    %v902 = vrsqrt.pop %v896
    %v903 = vrsqrt.pop %v897
    %v904 = vrsqrt.pop %v898
    %v905 = vmul.f32 %v847, %v899
    %v906 = vmul.f32 %v852, %v900
    %v907 = vmul.f32 %v857, %v901
    %v908 = vmul.f32 %v862, %v902
    %v909 = vmul.f32 %v867, %v903
    %v910 = vmul.f32 %v872, %v904
    %911 = vst [vmem:[#allocation14] sm:$0xff] %v905
    %912 = vst [vmem:[#allocation14 + $0x8] sm:$0xff] %v906
    %913 = vst [vmem:[#allocation14 + $0x10] sm:$0xff] %v907
    %914 = vst [vmem:[#allocation14 + $0x18] sm:$0xff] %v908
    %915 = vst [vmem:[#allocation14 + $0x20] sm:$0xff] %v909
    %916 = vst [vmem:[#allocation14 + $0x28] sm:$0xff] %v910
    // Predicated region
    $region58: #{tpu_custom_call.1} parent=1 // pred_check
      _
    $region59: #{tpu_custom_call.1} parent=1 // pred_check_branch
      %918 = sbr.rel (0) target = $region61
    $region60: #{tpu_custom_call.1} parent=1 // pred_region
      %s920 = ssub.s32 768, 768
      %921 = vsyncadd [#allocation4], %s920
      %s922 = sshll.u32 [#allocation14], 4
      %s923 = int_to_ptr.vmem [resolvable:$true] %s922
      %928 = dma.vmem_to_hbm [thread:$0]  %s923, 768, %s7, [#allocation4], 128, 128, 8
    $region61: #{tpu_custom_call.1} parent=1 // pred_fallthru
      _
    // Predicated region
    $region62: #{tpu_custom_call.1} parent=1 // pred_check
      _
    $region63: #{tpu_custom_call.1} parent=1 // pred_check_branch
      %930 = sbr.rel (0) target = $region65
    $region64: #{tpu_custom_call.1} parent=1 // pred_region
      %931 = dma.done [#allocation4], 768
    $region65: #{tpu_custom_call.1} parent=1 // pred_fallthru
      _
    %932 = vsyncpa [#allocation3], 1
    %933 = vsyncpa [#allocation6], 1
    %934 = vsyncpa [#allocation9], 1
    %935 = vsyncpa [#allocation12], 1
    %936 = vsyncpa [#allocation4], 1

</llo_original>
